<compile_context>
chip_gen: v6e
topology: v6e:2x2x1
jax: 0.10.0
libtpu: 0.0.40
codegen_flags: <defaults>
</compile_context>

<pallas_src>
import functools

import jax
import jax.numpy as jnp
from jax.experimental import pallas as pl
from jax.experimental.pallas import tpu as pltpu


# ------------------------------ fused kernel --------------------------------

def _fused_forward_kernel(x_ref, w1_ref, b1_ref, w2_ref, b2_ref, w3_ref,
                          b3_ref, wf_ref, bf_ref, o_ref, *, B, L, K):
    # x_ref : (B, L, Cin)          input batch tile (channels-last)
    # wN_ref: (K*Cin_N, Cout_N)    conv weights, im2col layout (tap-major rows)
    # bN_ref: (1, Cout_N)
    # wf_ref: (H, O), bf_ref: (1, O)
    # o_ref : (B, L, O)
    pad_l = (K - 1) // 2

    def shifted(h, s):
        # rows l -> h[:, l + s, :], zero-filled where l + s is out of [0, L).
        C = h.shape[-1]
        if s == 0:
            return h
        z = jnp.zeros((B, abs(s), C), h.dtype)
        if s < 0:
            return jnp.concatenate([z, h[:, :L + s, :]], axis=1)
        return jnp.concatenate([h[:, s:, :], z], axis=1)

    def conv_relu(h, w_ref, b_ref):
        # h: (B, L, C) -> im2col slab (B*L, K*C) -> one MXU matmul per layer.
        slab = jnp.concatenate([shifted(h, k - pad_l) for k in range(K)],
                               axis=-1).reshape(B * L, -1)
        y = jnp.dot(slab, w_ref[...], preferred_element_type=jnp.float32)
        y = jnp.maximum(y + b_ref[...], 0.0)
        return y.reshape(B, L, -1)

    h = x_ref[...].astype(jnp.float32)
    h = conv_relu(h, w1_ref, b1_ref)          # conv1 + ReLU
    h = conv_relu(h, w2_ref, b2_ref)          # conv2 + ReLU
    h = conv_relu(h, w3_ref, b3_ref)          # conv3 + ReLU
    # Final Linear + Sigmoid fused into the same kernel (single HBM store).
    y = jnp.dot(h.reshape(B * L, -1), wf_ref[...],
                preferred_element_type=jnp.float32) + bf_ref[...]
    o_ref[...] = jax.nn.sigmoid(y).reshape(B, L, -1).astype(o_ref.dtype)


# -------------------------------- wrapper ------------------------------------

def prepare_params(params):
    """One-time layout transforms (hoisted out of the forward pass)."""
    def conv_mat(w):                      # (Cout, Cin, K) -> (K*Cin, Cout)
        Cout, Cin, K = w.shape
        return jnp.transpose(w, (2, 1, 0)).reshape(K * Cin, Cout)

    return {
        "w1": conv_mat(params["w1"]), "b1": params["b1"].reshape(1, -1),
        "w2": conv_mat(params["w2"]), "b2": params["b2"].reshape(1, -1),
        "w3": conv_mat(params["w3"]), "b3": params["b3"].reshape(1, -1),
        "wf": params["wf"].T,         "bf": params["bf"].reshape(1, -1),
    }


def conv1d_model_forward(x, prep, *, batch_tile=None):
    """x: (B, L, input_dim); prep: output of prepare_params()."""
    B, L, Cin = x.shape
    H = prep["w1"].shape[1]
    O = prep["wf"].shape[1]
    K = prep["w1"].shape[0] // Cin
    bt = B if batch_tile is None else batch_tile
    assert B % bt == 0, "batch_tile must divide batch"

    kernel = functools.partial(_fused_forward_kernel, B=bt, L=L, K=K)
    return pl.pallas_call(
        kernel,
        out_shape=jax.ShapeDtypeStruct((B, L, O), x.dtype),
        grid_spec=pltpu.PrefetchScalarGridSpec(
            num_scalar_prefetch=0,
            grid=(B // bt,),                 # grid=(1,) at B=2; parallel axis
            in_specs=[                       # hook for megacore at large B
                pl.BlockSpec((bt, L, Cin), lambda i: (i, 0, 0)),
                pl.BlockSpec((K * Cin, H), lambda i: (0, 0)),
                pl.BlockSpec((1, H), lambda i: (0, 0)),
                pl.BlockSpec((K * H, H), lambda i: (0, 0)),
                pl.BlockSpec((1, H), lambda i: (0, 0)),
                pl.BlockSpec((K * H, H), lambda i: (0, 0)),
                pl.BlockSpec((1, H), lambda i: (0, 0)),
                pl.BlockSpec((H, O), lambda i: (0, 0)),
                pl.BlockSpec((1, O), lambda i: (0, 0)),
            ],
            out_specs=pl.BlockSpec((bt, L, O), lambda i: (i, 0, 0)),
        ),
        compiler_params=pltpu.CompilerParams(
            dimension_semantics=("parallel",)),
    )(x, prep["w1"], prep["b1"], prep["w2"], prep["b2"],
      prep["w3"], prep["b3"], prep["wf"], prep["bf"])


# ----------------------------- reference (pure JAX) --------------------------

def _ref_conv1d_relu(x, w, b):
    B, L, Cin = x.shape
    Cout, _, K = w.shape
    pad_l = (K - 1) // 2
    x_pad = jnp.pad(x, ((0, 0), (pad_l, K - 1 - pad_l), (0, 0)))
    wk = jnp.transpose(w, (2, 1, 0))
    acc = jnp.zeros((B, L, Cout), jnp.float32)
    for k in range(K):
        acc = acc + jnp.einsum("blc,cd->bld", x_pad[:, k:k + L, :], wk[k])
    return jnp.maximum(acc + b[None, None, :], 0.0)


def _ref_forward(x, p):
    h = _ref_conv1d_relu(x, p["w1"], p["b1"])
    h = _ref_conv1d_relu(h, p["w2"], p["b2"])
    h = _ref_conv1d_relu(h, p["w3"], p["b3"])
    return jax.nn.sigmoid(jnp.einsum("blh,oh->blo", h, p["wf"]) + p["bf"])


# ------------------------------- parameter init ------------------------------

def init_params(key, input_dim, hidden_dim, output_dim, kernel_size):
    """PyTorch-default-style uniform init (bound = 1/sqrt(fan_in)), deterministic."""
    ks = jax.random.split(key, 8)

    def u(k, shape, fan_in):
        bound = 1.0 / jnp.sqrt(float(fan_in))
        return jax.random.uniform(k, shape, jnp.float32, -bound, bound)

    K = kernel_size
    return {
        "w1": u(ks[0], (hidden_dim, input_dim, K), input_dim * K),
        "b1": u(ks[1], (hidden_dim,), input_dim * K),
        "w2": u(ks[2], (hidden_dim, hidden_dim, K), hidden_dim * K),
        "b2": u(ks[3], (hidden_dim,), hidden_dim * K),
        "w3": u(ks[4], (hidden_dim, hidden_dim, K), hidden_dim * K),
        "b3": u(ks[5], (hidden_dim,), hidden_dim * K),
        "wf": u(ks[6], (output_dim, hidden_dim), hidden_dim),
        "bf": u(ks[7], (output_dim,), hidden_dim),
    }


# ----------------------------------- main ------------------------------------

if __name__ == "__main__":
    # Small shapes consistent with the module: x is (batch, seq_len, input_dim).
    B, L = 2, 16
    input_dim, hidden_dim, output_dim, kernel_size = 32, 32, 3, 3

    key = jax.random.PRNGKey(0)
    kx, kp = jax.random.split(key)
    x = jax.random.normal(kx, (B, L, input_dim), jnp.float32)
    params = init_params(kp, input_dim, hidden_dim, output_dim, kernel_size)
    prep = jax.tree_util.tree_map(jax.block_until_ready, prepare_params(params))

    out = jax.block_until_ready(conv1d_model_forward(x, prep))
    ref = jax.block_until_ready(_ref_forward(x, params))

    assert out.shape == (B, L, output_dim), out.shape
    max_err = float(jnp.max(jnp.abs(out - ref)))
    assert jnp.allclose(out, ref, atol=2e-5, rtol=2e-5), max_err
    print("KERNEL_OK")
</pallas_src>

<mosaic_0001>
module attributes {stable_mosaic.version = 11 : i64} {
  func.func @_fused_forward_kernel(%arg0: i32, %arg1: memref<2x16x32xf32, #tpu.memory_space<vmem>>, %arg2: memref<96x32xf32, #tpu.memory_space<vmem>>, %arg3: memref<1x32xf32, #tpu.memory_space<vmem>>, %arg4: memref<96x32xf32, #tpu.memory_space<vmem>>, %arg5: memref<1x32xf32, #tpu.memory_space<vmem>>, %arg6: memref<96x32xf32, #tpu.memory_space<vmem>>, %arg7: memref<1x32xf32, #tpu.memory_space<vmem>>, %arg8: memref<32x3xf32, #tpu.memory_space<vmem>>, %arg9: memref<1x3xf32, #tpu.memory_space<vmem>>, %arg10: memref<2x16x3xf32, #tpu.memory_space<vmem>>) attributes {dimension_semantics = [#tpu.dimension_semantics<parallel>], iteration_bounds = array<i64: 1>, scalar_prefetch = 0 : i64, scratch_operands = 0 : i64, tpu.core_type = #tpu.core_type<tc>, window_params = [{transform_indices = @transform_0, window_bounds = array<i64: 2, 16, 32>}, {pipeline_mode = #tpu.pipeline_mode<synchronous>, transform_indices = @transform_1, window_bounds = array<i64: 96, 32>}, {pipeline_mode = #tpu.pipeline_mode<synchronous>, transform_indices = @transform_2, window_bounds = array<i64: 1, 32>}, {pipeline_mode = #tpu.pipeline_mode<synchronous>, transform_indices = @transform_3, window_bounds = array<i64: 96, 32>}, {pipeline_mode = #tpu.pipeline_mode<synchronous>, transform_indices = @transform_4, window_bounds = array<i64: 1, 32>}, {pipeline_mode = #tpu.pipeline_mode<synchronous>, transform_indices = @transform_5, window_bounds = array<i64: 96, 32>}, {pipeline_mode = #tpu.pipeline_mode<synchronous>, transform_indices = @transform_6, window_bounds = array<i64: 1, 32>}, {pipeline_mode = #tpu.pipeline_mode<synchronous>, transform_indices = @transform_7, window_bounds = array<i64: 32, 3>}, {pipeline_mode = #tpu.pipeline_mode<synchronous>, transform_indices = @transform_8, window_bounds = array<i64: 1, 3>}, {transform_indices = @transform_9, window_bounds = array<i64: 2, 16, 3>}]} {
    %c0 = arith.constant 0 : index
    %c0_0 = arith.constant 0 : index
    %c0_1 = arith.constant 0 : index
    %0 = vector.load %arg1[%c0, %c0_0, %c0_1] : memref<2x16x32xf32, #tpu.memory_space<vmem>>, vector<2x16x32xf32>
    %cst = arith.constant 0.000000e+00 : f32
    %1 = vector.broadcast %cst : f32 to vector<2x1x32xf32>
    %2 = vector.extract_strided_slice %0 {offsets = [0, 0, 0], sizes = [2, 15, 32], strides = [1, 1, 1]} : vector<2x16x32xf32> to vector<2x15x32xf32>
    %3 = tpu.concatenate %1, %2 in 1 : vector<2x1x32xf32>, vector<2x15x32xf32> -> vector<2x16x32xf32>
    %cst_2 = arith.constant 0.000000e+00 : f32
    %4 = vector.broadcast %cst_2 : f32 to vector<2x1x32xf32>
    %5 = vector.extract_strided_slice %0 {offsets = [0, 1, 0], sizes = [2, 15, 32], strides = [1, 1, 1]} : vector<2x16x32xf32> to vector<2x15x32xf32>
    %6 = tpu.concatenate %5, %4 in 1 : vector<2x15x32xf32>, vector<2x1x32xf32> -> vector<2x16x32xf32>
    %7 = tpu.concatenate %3, %0, %6 in 2 : vector<2x16x32xf32>, vector<2x16x32xf32>, vector<2x16x32xf32> -> vector<2x16x96xf32>
    %8 = vector.shape_cast %7 : vector<2x16x96xf32> to vector<32x96xf32>
    %c0_3 = arith.constant 0 : index
    %c0_4 = arith.constant 0 : index
    %9 = vector.load %arg2[%c0_3, %c0_4] : memref<96x32xf32, #tpu.memory_space<vmem>>, vector<96x32xf32>
    %cst_5 = arith.constant dense<0.000000e+00> : vector<32x32xf32>
    %10 = tpu.matmul %8, %9, %cst_5 {dimension_numbers = #tpu.dot_dimension_numbers<[1], [0], [0], [1], [0, 0, 1, 1], [], []>} : vector<32x96xf32>, vector<96x32xf32>, vector<32x32xf32> -> vector<32x32xf32>
    %c0_6 = arith.constant 0 : index
    %c0_7 = arith.constant 0 : index
    %11 = vector.load %arg3[%c0_6, %c0_7] : memref<1x32xf32, #tpu.memory_space<vmem>>, vector<1x32xf32>
    %12 = vector.broadcast %11 : vector<1x32xf32> to vector<32x32xf32>
    %13 = arith.addf %10, %12 : vector<32x32xf32>
    %cst_8 = arith.constant 0.000000e+00 : f32
    %14 = vector.broadcast %cst_8 : f32 to vector<32x32xf32>
    %15 = arith.maximumf %13, %14 : vector<32x32xf32>
    %16 = vector.shape_cast %15 : vector<32x32xf32> to vector<2x16x32xf32>
    %cst_9 = arith.constant 0.000000e+00 : f32
    %17 = vector.broadcast %cst_9 : f32 to vector<2x1x32xf32>
    %18 = vector.extract_strided_slice %16 {offsets = [0, 0, 0], sizes = [2, 15, 32], strides = [1, 1, 1]} : vector<2x16x32xf32> to vector<2x15x32xf32>
    %19 = tpu.concatenate %17, %18 in 1 : vector<2x1x32xf32>, vector<2x15x32xf32> -> vector<2x16x32xf32>
    %cst_10 = arith.constant 0.000000e+00 : f32
    %20 = vector.broadcast %cst_10 : f32 to vector<2x1x32xf32>
    %21 = vector.extract_strided_slice %16 {offsets = [0, 1, 0], sizes = [2, 15, 32], strides = [1, 1, 1]} : vector<2x16x32xf32> to vector<2x15x32xf32>
    %22 = tpu.concatenate %21, %20 in 1 : vector<2x15x32xf32>, vector<2x1x32xf32> -> vector<2x16x32xf32>
    %23 = tpu.concatenate %19, %16, %22 in 2 : vector<2x16x32xf32>, vector<2x16x32xf32>, vector<2x16x32xf32> -> vector<2x16x96xf32>
    %24 = vector.shape_cast %23 : vector<2x16x96xf32> to vector<32x96xf32>
    %c0_11 = arith.constant 0 : index
    %c0_12 = arith.constant 0 : index
    %25 = vector.load %arg4[%c0_11, %c0_12] : memref<96x32xf32, #tpu.memory_space<vmem>>, vector<96x32xf32>
    %cst_13 = arith.constant dense<0.000000e+00> : vector<32x32xf32>
    %26 = tpu.matmul %24, %25, %cst_13 {dimension_numbers = #tpu.dot_dimension_numbers<[1], [0], [0], [1], [0, 0, 1, 1], [], []>} : vector<32x96xf32>, vector<96x32xf32>, vector<32x32xf32> -> vector<32x32xf32>
    %c0_14 = arith.constant 0 : index
    %c0_15 = arith.constant 0 : index
    %27 = vector.load %arg5[%c0_14, %c0_15] : memref<1x32xf32, #tpu.memory_space<vmem>>, vector<1x32xf32>
    %28 = vector.broadcast %27 : vector<1x32xf32> to vector<32x32xf32>
    %29 = arith.addf %26, %28 : vector<32x32xf32>
    %cst_16 = arith.constant 0.000000e+00 : f32
    %30 = vector.broadcast %cst_16 : f32 to vector<32x32xf32>
    %31 = arith.maximumf %29, %30 : vector<32x32xf32>
    %32 = vector.shape_cast %31 : vector<32x32xf32> to vector<2x16x32xf32>
    %cst_17 = arith.constant 0.000000e+00 : f32
    %33 = vector.broadcast %cst_17 : f32 to vector<2x1x32xf32>
    %34 = vector.extract_strided_slice %32 {offsets = [0, 0, 0], sizes = [2, 15, 32], strides = [1, 1, 1]} : vector<2x16x32xf32> to vector<2x15x32xf32>
    %35 = tpu.concatenate %33, %34 in 1 : vector<2x1x32xf32>, vector<2x15x32xf32> -> vector<2x16x32xf32>
    %cst_18 = arith.constant 0.000000e+00 : f32
    %36 = vector.broadcast %cst_18 : f32 to vector<2x1x32xf32>
    %37 = vector.extract_strided_slice %32 {offsets = [0, 1, 0], sizes = [2, 15, 32], strides = [1, 1, 1]} : vector<2x16x32xf32> to vector<2x15x32xf32>
    %38 = tpu.concatenate %37, %36 in 1 : vector<2x15x32xf32>, vector<2x1x32xf32> -> vector<2x16x32xf32>
    %39 = tpu.concatenate %35, %32, %38 in 2 : vector<2x16x32xf32>, vector<2x16x32xf32>, vector<2x16x32xf32> -> vector<2x16x96xf32>
    %40 = vector.shape_cast %39 : vector<2x16x96xf32> to vector<32x96xf32>
    %c0_19 = arith.constant 0 : index
    %c0_20 = arith.constant 0 : index
    %41 = vector.load %arg6[%c0_19, %c0_20] : memref<96x32xf32, #tpu.memory_space<vmem>>, vector<96x32xf32>
    %cst_21 = arith.constant dense<0.000000e+00> : vector<32x32xf32>
    %42 = tpu.matmul %40, %41, %cst_21 {dimension_numbers = #tpu.dot_dimension_numbers<[1], [0], [0], [1], [0, 0, 1, 1], [], []>} : vector<32x96xf32>, vector<96x32xf32>, vector<32x32xf32> -> vector<32x32xf32>
    %c0_22 = arith.constant 0 : index
    %c0_23 = arith.constant 0 : index
    %43 = vector.load %arg7[%c0_22, %c0_23] : memref<1x32xf32, #tpu.memory_space<vmem>>, vector<1x32xf32>
    %44 = vector.broadcast %43 : vector<1x32xf32> to vector<32x32xf32>
    %45 = arith.addf %42, %44 : vector<32x32xf32>
    %cst_24 = arith.constant 0.000000e+00 : f32
    %46 = vector.broadcast %cst_24 : f32 to vector<32x32xf32>
    %47 = arith.maximumf %45, %46 : vector<32x32xf32>
    %48 = vector.shape_cast %47 : vector<32x32xf32> to vector<2x16x32xf32>
    %49 = vector.shape_cast %48 : vector<2x16x32xf32> to vector<32x32xf32>
    %c0_25 = arith.constant 0 : index
    %c0_26 = arith.constant 0 : index
    %50 = vector.load %arg8[%c0_25, %c0_26] : memref<32x3xf32, #tpu.memory_space<vmem>>, vector<32x3xf32>
    %cst_27 = arith.constant dense<0.000000e+00> : vector<32x3xf32>
    %51 = tpu.matmul %49, %50, %cst_27 {dimension_numbers = #tpu.dot_dimension_numbers<[1], [0], [0], [1], [0, 0, 1, 1], [], []>} : vector<32x32xf32>, vector<32x3xf32>, vector<32x3xf32> -> vector<32x3xf32>
    %c0_28 = arith.constant 0 : index
    %c0_29 = arith.constant 0 : index
    %52 = vector.load %arg9[%c0_28, %c0_29] : memref<1x3xf32, #tpu.memory_space<vmem>>, vector<1x3xf32>
    %53 = vector.broadcast %52 : vector<1x3xf32> to vector<32x3xf32>
    %54 = arith.addf %51, %53 : vector<32x3xf32>
    %55 = arith.negf %54 : vector<32x3xf32>
    %56 = math.exp %55 : vector<32x3xf32>
    %cst_30 = arith.constant 1.000000e+00 : f32
    %57 = vector.broadcast %cst_30 : f32 to vector<32x3xf32>
    %58 = arith.addf %57, %56 : vector<32x3xf32>
    %59 = arith.divf %57, %58 : vector<32x3xf32>
    %60 = vector.shape_cast %59 : vector<32x3xf32> to vector<2x16x3xf32>
    %c0_31 = arith.constant 0 : index
    %c0_32 = arith.constant 0 : index
    %c0_33 = arith.constant 0 : index
    %61 = vector.load %arg10[%c0_31, %c0_32, %c0_33] : memref<2x16x3xf32, #tpu.memory_space<vmem>>, vector<2x16x3xf32>
    tpu.vector_store %arg10[%c0_31, %c0_32, %c0_33], %60 {strides = array<i32>} : memref<2x16x3xf32, #tpu.memory_space<vmem>>, vector<2x16x3xf32>,
    return
  }
  func.func @transform_0(%arg0: i32) -> (i32, i32, i32) {
    %c0_i32 = arith.constant 0 : i32
    %c0_i32_0 = arith.constant 0 : i32
    %c0_i32_1 = arith.constant 0 : i32
    return %arg0, %c0_i32, %c0_i32_0 : i32, i32, i32
  }
  func.func @transform_1(%arg0: i32) -> (i32, i32) {
    %c0_i32 = arith.constant 0 : i32
    %c0_i32_0 = arith.constant 0 : i32
    %c0_i32_1 = arith.constant 0 : i32
    return %c0_i32, %c0_i32_0 : i32, i32
  }
  func.func @transform_2(%arg0: i32) -> (i32, i32) {
    %c0_i32 = arith.constant 0 : i32
    %c0_i32_0 = arith.constant 0 : i32
    %c0_i32_1 = arith.constant 0 : i32
    return %c0_i32, %c0_i32_0 : i32, i32
  }
  func.func @transform_3(%arg0: i32) -> (i32, i32) {
    %c0_i32 = arith.constant 0 : i32
    %c0_i32_0 = arith.constant 0 : i32
    %c0_i32_1 = arith.constant 0 : i32
    return %c0_i32, %c0_i32_0 : i32, i32
  }
  func.func @transform_4(%arg0: i32) -> (i32, i32) {
    %c0_i32 = arith.constant 0 : i32
    %c0_i32_0 = arith.constant 0 : i32
    %c0_i32_1 = arith.constant 0 : i32
    return %c0_i32, %c0_i32_0 : i32, i32
  }
  func.func @transform_5(%arg0: i32) -> (i32, i32) {
    %c0_i32 = arith.constant 0 : i32
    %c0_i32_0 = arith.constant 0 : i32
    %c0_i32_1 = arith.constant 0 : i32
    return %c0_i32, %c0_i32_0 : i32, i32
  }
  func.func @transform_6(%arg0: i32) -> (i32, i32) {
    %c0_i32 = arith.constant 0 : i32
    %c0_i32_0 = arith.constant 0 : i32
    %c0_i32_1 = arith.constant 0 : i32
    return %c0_i32, %c0_i32_0 : i32, i32
  }
  func.func @transform_7(%arg0: i32) -> (i32, i32) {
    %c0_i32 = arith.constant 0 : i32
    %c0_i32_0 = arith.constant 0 : i32
    %c0_i32_1 = arith.constant 0 : i32
    return %c0_i32, %c0_i32_0 : i32, i32
  }
  func.func @transform_8(%arg0: i32) -> (i32, i32) {
    %c0_i32 = arith.constant 0 : i32
    %c0_i32_0 = arith.constant 0 : i32
    %c0_i32_1 = arith.constant 0 : i32
    return %c0_i32, %c0_i32_0 : i32, i32
  }
  func.func @transform_9(%arg0: i32) -> (i32, i32, i32) {
    %c0_i32 = arith.constant 0 : i32
    %c0_i32_0 = arith.constant 0 : i32
    %c0_i32_1 = arith.constant 0 : i32
    return %arg0, %c0_i32, %c0_i32_0 : i32, i32, i32
  }
}

</mosaic_0001>

<llo_original>
// kernel: tpu_custom_call.1
$region0: #{tpu_custom_call.1}
  #allocation0 [shape = 'u32[]', space=smem, size = 0x4, offset = 0x4, fixed_abs, tag = 'smem constant byte address 0x4 - core index']
  #allocation1 [shape = 'u32[144,128]{1,0:T(1,128)}', space=vmem, size = 0x12000, scoped, tag = 'internal scratch']
  %s0 = inlined_call_operand.vmem [shape: f32[2,16,32], index: 0, kind: input, shape index: {}]
  %s1 = inlined_call_operand.vmem [shape: f32[96,32], index: 1, kind: input, shape index: {}]
  %s2 = inlined_call_operand.vmem [shape: f32[1,32], index: 2, kind: input, shape index: {}]
  %s3 = inlined_call_operand.vmem [shape: f32[96,32], index: 3, kind: input, shape index: {}]
  %s4 = inlined_call_operand.vmem [shape: f32[1,32], index: 4, kind: input, shape index: {}]
  %s5 = inlined_call_operand.vmem [shape: f32[96,32], index: 5, kind: input, shape index: {}]
  %s6 = inlined_call_operand.vmem [shape: f32[1,32], index: 6, kind: input, shape index: {}]
  %s7 = inlined_call_operand.vmem [shape: f32[32,3], index: 7, kind: input, shape index: {}]
  %s8 = inlined_call_operand.vmem [shape: f32[1,3], index: 8, kind: input, shape index: {}]
  %s9 = inlined_call_operand.vmem [shape: f32[2,16,3], index: 9, kind: output, shape index: {}]
  %s10 = sld [smem:[#allocation0]]
  $region46: #{tpu_custom_call.1} parent=0
    _
  %s12 = ssub.s32 1, %s10
  %s13 = scalar_select 0, %s12, %s10
  // Predicated region
  $region2: #{tpu_custom_call.1} parent=0 // pred_check
    _
  $region3: #{tpu_custom_call.1} parent=0 // pred_check_branch
    %15 = sbr.rel (0) target = $region5
  $region4: #{tpu_custom_call.1} parent=0 // pred_region
    _
  $region5: #{tpu_custom_call.1} parent=0 // pred_fallthru
    _
  // Predicated region
  $region6: #{tpu_custom_call.1} parent=0 // pred_check
    _
  $region7: #{tpu_custom_call.1} parent=0 // pred_check_branch
    %17 = sbr.rel (0) target = $region9
  $region8: #{tpu_custom_call.1} parent=0 // pred_region
    _
  $region9: #{tpu_custom_call.1} parent=0 // pred_fallthru
    _
  // Predicated region
  $region10: #{tpu_custom_call.1} parent=0 // pred_check
    _
  $region11: #{tpu_custom_call.1} parent=0 // pred_check_branch
    %19 = sbr.rel (0) target = $region13
  $region12: #{tpu_custom_call.1} parent=0 // pred_region
    _
  $region13: #{tpu_custom_call.1} parent=0 // pred_fallthru
    _
  // Predicated region
  $region14: #{tpu_custom_call.1} parent=0 // pred_check
    _
  $region15: #{tpu_custom_call.1} parent=0 // pred_check_branch
    %21 = sbr.rel (0) target = $region17
  $region16: #{tpu_custom_call.1} parent=0 // pred_region
    _
  $region17: #{tpu_custom_call.1} parent=0 // pred_fallthru
    _
  // Predicated region
  $region18: #{tpu_custom_call.1} parent=0 // pred_check
    _
  $region19: #{tpu_custom_call.1} parent=0 // pred_check_branch
    %23 = sbr.rel (0) target = $region21
  $region20: #{tpu_custom_call.1} parent=0 // pred_region
    _
  $region21: #{tpu_custom_call.1} parent=0 // pred_fallthru
    _
  // Predicated region
  $region22: #{tpu_custom_call.1} parent=0 // pred_check
    _
  $region23: #{tpu_custom_call.1} parent=0 // pred_check_branch
    %25 = sbr.rel (0) target = $region25
  $region24: #{tpu_custom_call.1} parent=0 // pred_region
    _
  $region25: #{tpu_custom_call.1} parent=0 // pred_fallthru
    _
  // Predicated region
  $region26: #{tpu_custom_call.1} parent=0 // pred_check
    _
  $region27: #{tpu_custom_call.1} parent=0 // pred_check_branch
    %27 = sbr.rel (0) target = $region29
  $region28: #{tpu_custom_call.1} parent=0 // pred_region
    _
  $region29: #{tpu_custom_call.1} parent=0 // pred_fallthru
    _
  // Predicated region
  $region30: #{tpu_custom_call.1} parent=0 // pred_check
    _
  $region31: #{tpu_custom_call.1} parent=0 // pred_check_branch
    %29 = sbr.rel (0) target = $region33
  $region32: #{tpu_custom_call.1} parent=0 // pred_region
    _
  $region33: #{tpu_custom_call.1} parent=0 // pred_fallthru
    _
  // Predicated region
  $region34: #{tpu_custom_call.1} parent=0 // pred_check
    _
  $region35: #{tpu_custom_call.1} parent=0 // pred_check_branch
    %31 = sbr.rel (0) target = $region37
  $region36: #{tpu_custom_call.1} parent=0 // pred_region
    _
  $region37: #{tpu_custom_call.1} parent=0 // pred_fallthru
    _
  %v32 = vld [vmem:[%s0] sm:$0xff]
  %v33 = vld [vmem:[%s0 + $0x8] sm:$0xff]
  %v34 = vld [vmem:[%s0 + $0x10] sm:$0xff]
  %v35 = vld [vmem:[%s0 + $0x18] sm:$0xff]
  %vm40 = vcmask 1040384
  %v41 = vrot.slane %v32, 7
  %v42 = vrot.slane %v33, 7
  %v43 = vsel %vm40, %v41, %v42
  %v44 = vrot.slane %v34, 7
  %v45 = vrot.slane %v35, 7
  %v46 = vsel %vm40, %v44, %v45
  %v51 = vsel %vm40, 0.0, %v41
  %v52 = vsel %vm40, 0.0, %v44
  %vm53 = vcmask 1046528
  %v54 = vrot.slane %v32, 1
  %v55 = vrot.slane %v33, 1
  %v56 = vsel %vm53, %v54, %v55
  %v57 = vrot.slane %v34, 1
  %v58 = vrot.slane %v35, 1
  %v59 = vsel %vm53, %v57, %v58
  %v62 = vsel %vm53, %v55, 0.0
  %v63 = vsel %vm53, %v58, 0.0
  %64 = vrot.lane.b32.xlu0 %v32, 32
  %v65 = vpop.permute.xlu0 %64
  %66 = vrot.lane.b32.xlu0 %v33, 32
  %v67 = vpop.permute.xlu0 %66
  %68 = vrot.lane.b32.xlu0 %v34, 32
  %v69 = vpop.permute.xlu0 %68
  %70 = vrot.lane.b32.xlu0 %v35, 32
  %v71 = vpop.permute.xlu0 %70
  %78 = vrot.lane.b32.xlu0 %v56, 64
  %v79 = vpop.permute.xlu0 %78
  %80 = vrot.lane.b32.xlu0 %v62, 64
  %v81 = vpop.permute.xlu0 %80
  %82 = vrot.lane.b32.xlu0 %v59, 64
  %v83 = vpop.permute.xlu0 %82
  %84 = vrot.lane.b32.xlu0 %v63, 64
  %v85 = vpop.permute.xlu0 %84
  %vm90 = vcmask 261120
  %v91 = vsel %vm90, %v51, %v65
  %v92 = vsel %vm90, %v43, %v67
  %v93 = vsel %vm90, %v52, %v69
  %v94 = vsel %vm90, %v46, %v71
  %vm95 = vcmask 523264
  %v96 = vsel %vm95, %v91, %v79
  %v97 = vsel %vm95, %v92, %v81
  %v98 = vsel %vm95, %v93, %v83
  %v99 = vsel %vm95, %v94, %v85
  %v100 = vld [vmem:[%s1] sm:$0xff]
  %v101 = vld [vmem:[%s1 + $0x8] sm:$0xff]
  %v102 = vld [vmem:[%s1 + $0x10] sm:$0xff]
  %v103 = vld [vmem:[%s1 + $0x18] sm:$0xff]
  %v104 = vld [vmem:[%s1 + $0x20] sm:$0xff]
  %v105 = vld [vmem:[%s1 + $0x28] sm:$0xff]
  %v106 = vld [vmem:[%s1 + $0x30] sm:$0xff]
  %v107 = vld [vmem:[%s1 + $0x38] sm:$0xff]
  %v108 = vld [vmem:[%s1 + $0x40] sm:$0xff]
  %v109 = vld [vmem:[%s1 + $0x48] sm:$0xff]
  %v110 = vld [vmem:[%s1 + $0x50] sm:$0xff]
  %v111 = vld [vmem:[%s1 + $0x58] sm:$0xff]
  %v112 = vld [vmem:[%s2] sm:$0x1]
  %v114 = vlaneseq
  %v115 = vshrl.u32 %v114, 7
  %v116 = vsub.s32 0, %v115
  %v117 = vrot.slane %v112, %v116
  %vm119 = vcmask 785408
  %v121 = vsel %vm119, %v96, 0
  %v124 = vsel %vm119, %v97, 0
  %v127 = vsel %vm119, %v98, 0
  %v130 = vsel %vm119, %v99, 0
  %132 = vmatprep.subr.mxu0 0.0
  %133 = vmatpush1.msra.mxu0 0.0
  %134 = vmatprep.subr.mxu0 0.0
  %135 = vmatpush1.msra.mxu0 0.0
  %136 = vmatprep.subr.mxu0 0.0
  %137 = vmatpush1.msra.mxu0 0.0
  %138 = vmatprep.subr.mxu0 0.0
  %139 = vmatpush1.msra.mxu0 0.0
  %140 = vmatprep.subr.mxu0 0.0
  %141 = vmatpush1.msra.mxu0 %v111
  %142 = vmatprep.subr.mxu0 0.0
  %143 = vmatpush1.msra.mxu0 %v110
  %144 = vmatprep.subr.mxu0 0.0
  %145 = vmatpush1.msra.mxu0 %v109
  %146 = vmatprep.subr.mxu0 0.0
  %147 = vmatpush1.msra.mxu0 %v108
  %148 = vmatprep.subr.mxu0 0.0
  %149 = vmatpush1.msra.mxu0 %v107
  %150 = vmatprep.subr.mxu0 0.0
  %151 = vmatpush1.msra.mxu0 %v106
  %152 = vmatprep.subr.mxu0 0.0
  %153 = vmatpush1.msra.mxu0 %v105
  %154 = vmatprep.subr.mxu0 0.0
  %155 = vmatpush1.msra.mxu0 %v104
  %156 = vmatprep.subr.mxu0 0.0
  %157 = vmatpush1.msra.mxu0 %v103
  %158 = vmatprep.subr.mxu0 0.0
  %159 = vmatpush1.msra.mxu0 %v102
  %160 = vmatprep.subr.mxu0 0.0
  %161 = vmatpush1.msra.mxu0 %v101
  %162 = vmatprep.subr.mxu0 0.0
  %163 = vmatpush1.msra.mxu0 %v100
  %164 = vmatprep.subr.mxu0 0.0
  %165 = vmatpush2.msra.mxu0 0.0
  %166 = vmatprep.subr.mxu0 0.0
  %167 = vmatpush2.msra.mxu0 0.0
  %168 = vmatprep.subr.mxu0 0.0
  %169 = vmatpush2.msra.mxu0 0.0
  %170 = vmatprep.subr.mxu0 0.0
  %171 = vmatpush2.msra.mxu0 0.0
  %172 = vmatprep.subr.mxu0 0.0
  %173 = vmatpush2.msra.mxu0 0.0
  %174 = vmatprep.subr.mxu0 0.0
  %175 = vmatpush2.msra.mxu0 0.0
  %176 = vmatprep.subr.mxu0 0.0
  %177 = vmatpush2.msra.mxu0 0.0
  %178 = vmatprep.subr.mxu0 0.0
  %179 = vmatpush2.msra.mxu0 0.0
  %180 = vmatprep.subr.mxu0 0.0
  %181 = vmatpush2.msra.mxu0 0.0
  %182 = vmatprep.subr.mxu0 0.0
  %183 = vmatpush2.msra.mxu0 0.0
  %184 = vmatprep.subr.mxu0 0.0
  %185 = vmatpush2.msra.mxu0 0.0
  %186 = vmatprep.subr.mxu0 0.0
  %187 = vmatpush2.msra.mxu0 0.0
  %188 = vmatprep.subr.mxu0 0.0
  %189 = vmatpush2.msra.mxu0 0.0
  %190 = vmatprep.subr.mxu0 0.0
  %191 = vmatpush2.msra.mxu0 0.0
  %192 = vmatprep.subr.mxu0 0.0
  %193 = vmatpush2.msra.mxu0 0.0
  %194 = vmatprep.subr.mxu0 0.0
  %195 = vmatpush2.msra.mxu0 0.0
  %196 = vmatprep.mubr.f32.mxu0 0.0
  %197 = vmatmul.mubr.f32.gmra.mxu0 %v121
  %v198 = vpop.f32.mrf.mxu0
  %v199 = vadd.f32 %v117, %v198
  %v200 = vpop.f32.mrf.mxu0
  %201 = vmatprep.mubr.f32.mxu0 0.0
  %202 = vmatmul.mubr.f32.gmra.mxu0 %v124
  %v203 = vpop.f32.mrf.mxu0
  %v204 = vadd.f32 %v117, %v203
  %v205 = vpop.f32.mrf.mxu0
  %206 = vmatprep.mubr.f32.mxu0 0.0
  %207 = vmatmul.mubr.f32.gmra.mxu0 %v127
  %v208 = vpop.f32.mrf.mxu0
  %v209 = vadd.f32 %v117, %v208
  %v210 = vpop.f32.mrf.mxu0
  %211 = vmatprep.mubr.f32.mxu0 0.0
  %212 = vmatmul.mubr.f32.gmra.mxu0 %v130
  %v213 = vpop.f32.mrf.mxu0
  %v214 = vadd.f32 %v117, %v213
  %v215 = vpop.f32.mrf.mxu0
  %216 = vdwg.mxu0
  %v217 = vmax.f32 %v199, 0.0
  %v218 = vmax.f32 %v204, 0.0
  %v219 = vmax.f32 %v209, 0.0
  %v220 = vmax.f32 %v214, 0.0
  %v225 = vrot.slane %v217, 7
  %v226 = vrot.slane %v218, 7
  %v227 = vsel %vm40, %v225, %v226
  %v228 = vrot.slane %v219, 7
  %v229 = vrot.slane %v220, 7
  %v230 = vsel %vm40, %v228, %v229
  %v235 = vsel %vm40, 0.0, %v225
  %v236 = vsel %vm40, 0.0, %v228
  %v237 = vrot.slane %v217, 1
  %v238 = vrot.slane %v218, 1
  %v239 = vsel %vm53, %v237, %v238
  %v240 = vrot.slane %v219, 1
  %v241 = vrot.slane %v220, 1
  %v242 = vsel %vm53, %v240, %v241
  %v245 = vsel %vm53, %v238, 0.0
  %v246 = vsel %vm53, %v241, 0.0
  %247 = vrot.lane.b32.xlu0 %v217, 32
  %v248 = vpop.permute.xlu0 %247
  %249 = vrot.lane.b32.xlu0 %v218, 32
  %v250 = vpop.permute.xlu0 %249
  %251 = vrot.lane.b32.xlu0 %v219, 32
  %v252 = vpop.permute.xlu0 %251
  %253 = vrot.lane.b32.xlu0 %v220, 32
  %v254 = vpop.permute.xlu0 %253
  %261 = vrot.lane.b32.xlu0 %v239, 64
  %v262 = vpop.permute.xlu0 %261
  %263 = vrot.lane.b32.xlu0 %v245, 64
  %v264 = vpop.permute.xlu0 %263
  %265 = vrot.lane.b32.xlu0 %v242, 64
  %v266 = vpop.permute.xlu0 %265
  %267 = vrot.lane.b32.xlu0 %v246, 64
  %v268 = vpop.permute.xlu0 %267
  %v273 = vsel %vm90, %v235, %v248
  %v274 = vsel %vm90, %v227, %v250
  %v275 = vsel %vm90, %v236, %v252
  %v276 = vsel %vm90, %v230, %v254
  %v277 = vsel %vm95, %v273, %v262
  %v278 = vsel %vm95, %v274, %v264
  %v279 = vsel %vm95, %v275, %v266
  %v280 = vsel %vm95, %v276, %v268
  %v281 = vld [vmem:[%s3] sm:$0xff]
  %v282 = vld [vmem:[%s3 + $0x8] sm:$0xff]
  %v283 = vld [vmem:[%s3 + $0x10] sm:$0xff]
  %v284 = vld [vmem:[%s3 + $0x18] sm:$0xff]
  %v285 = vld [vmem:[%s3 + $0x20] sm:$0xff]
  %v286 = vld [vmem:[%s3 + $0x28] sm:$0xff]
  %v287 = vld [vmem:[%s3 + $0x30] sm:$0xff]
  %v288 = vld [vmem:[%s3 + $0x38] sm:$0xff]
  %v289 = vld [vmem:[%s3 + $0x40] sm:$0xff]
  %v290 = vld [vmem:[%s3 + $0x48] sm:$0xff]
  %v291 = vld [vmem:[%s3 + $0x50] sm:$0xff]
  %v292 = vld [vmem:[%s3 + $0x58] sm:$0xff]
  %v293 = vld [vmem:[%s4] sm:$0x1]
  %v295 = vlaneseq
  %v296 = vshrl.u32 %v295, 7
  %v297 = vsub.s32 0, %v296
  %v298 = vrot.slane %v293, %v297
  %v301 = vsel %vm119, %v277, 0
  %v304 = vsel %vm119, %v278, 0
  %v307 = vsel %vm119, %v279, 0
  %v310 = vsel %vm119, %v280, 0
  %312 = vmatprep.subr.mxu0 0.0
  %313 = vmatpush1.msra.mxu0 0.0
  %314 = vmatprep.subr.mxu0 0.0
  %315 = vmatpush1.msra.mxu0 0.0
  %316 = vmatprep.subr.mxu0 0.0
  %317 = vmatpush1.msra.mxu0 0.0
  %318 = vmatprep.subr.mxu0 0.0
  %319 = vmatpush1.msra.mxu0 0.0
  %320 = vmatprep.subr.mxu0 0.0
  %321 = vmatpush1.msra.mxu0 %v292
  %322 = vmatprep.subr.mxu0 0.0
  %323 = vmatpush1.msra.mxu0 %v291
  %324 = vmatprep.subr.mxu0 0.0
  %325 = vmatpush1.msra.mxu0 %v290
  %326 = vmatprep.subr.mxu0 0.0
  %327 = vmatpush1.msra.mxu0 %v289
  %328 = vmatprep.subr.mxu0 0.0
  %329 = vmatpush1.msra.mxu0 %v288
  %330 = vmatprep.subr.mxu0 0.0
  %331 = vmatpush1.msra.mxu0 %v287
  %332 = vmatprep.subr.mxu0 0.0
  %333 = vmatpush1.msra.mxu0 %v286
  %334 = vmatprep.subr.mxu0 0.0
  %335 = vmatpush1.msra.mxu0 %v285
  %336 = vmatprep.subr.mxu0 0.0
  %337 = vmatpush1.msra.mxu0 %v284
  %338 = vmatprep.subr.mxu0 0.0
  %339 = vmatpush1.msra.mxu0 %v283
  %340 = vmatprep.subr.mxu0 0.0
  %341 = vmatpush1.msra.mxu0 %v282
  %342 = vmatprep.subr.mxu0 0.0
  %343 = vmatpush1.msra.mxu0 %v281
  %344 = vmatprep.subr.mxu0 0.0
  %345 = vmatpush2.msra.mxu0 0.0
  %346 = vmatprep.subr.mxu0 0.0
  %347 = vmatpush2.msra.mxu0 0.0
  %348 = vmatprep.subr.mxu0 0.0
  %349 = vmatpush2.msra.mxu0 0.0
  %350 = vmatprep.subr.mxu0 0.0
  %351 = vmatpush2.msra.mxu0 0.0
  %352 = vmatprep.subr.mxu0 0.0
  %353 = vmatpush2.msra.mxu0 0.0
  %354 = vmatprep.subr.mxu0 0.0
  %355 = vmatpush2.msra.mxu0 0.0
  %356 = vmatprep.subr.mxu0 0.0
  %357 = vmatpush2.msra.mxu0 0.0
  %358 = vmatprep.subr.mxu0 0.0
  %359 = vmatpush2.msra.mxu0 0.0
  %360 = vmatprep.subr.mxu0 0.0
  %361 = vmatpush2.msra.mxu0 0.0
  %362 = vmatprep.subr.mxu0 0.0
  %363 = vmatpush2.msra.mxu0 0.0
  %364 = vmatprep.subr.mxu0 0.0
  %365 = vmatpush2.msra.mxu0 0.0
  %366 = vmatprep.subr.mxu0 0.0
  %367 = vmatpush2.msra.mxu0 0.0
  %368 = vmatprep.subr.mxu0 0.0
  %369 = vmatpush2.msra.mxu0 0.0
  %370 = vmatprep.subr.mxu0 0.0
  %371 = vmatpush2.msra.mxu0 0.0
  %372 = vmatprep.subr.mxu0 0.0
  %373 = vmatpush2.msra.mxu0 0.0
  %374 = vmatprep.subr.mxu0 0.0
  %375 = vmatpush2.msra.mxu0 0.0
  %376 = vmatprep.mubr.f32.mxu0 0.0
  %377 = vmatmul.mubr.f32.gmra.mxu0 %v301
  %v378 = vpop.f32.mrf.mxu0
  %v379 = vadd.f32 %v298, %v378
  %v380 = vpop.f32.mrf.mxu0
  %381 = vmatprep.mubr.f32.mxu0 0.0
  %382 = vmatmul.mubr.f32.gmra.mxu0 %v304
  %v383 = vpop.f32.mrf.mxu0
  %v384 = vadd.f32 %v298, %v383
  %v385 = vpop.f32.mrf.mxu0
  %386 = vmatprep.mubr.f32.mxu0 0.0
  %387 = vmatmul.mubr.f32.gmra.mxu0 %v307
  %v388 = vpop.f32.mrf.mxu0
  %v389 = vadd.f32 %v298, %v388
  %v390 = vpop.f32.mrf.mxu0
  %391 = vmatprep.mubr.f32.mxu0 0.0
  %392 = vmatmul.mubr.f32.gmra.mxu0 %v310
  %v393 = vpop.f32.mrf.mxu0
  %v394 = vadd.f32 %v298, %v393
  %v395 = vpop.f32.mrf.mxu0
  %396 = vdwg.mxu0
  %v397 = vmax.f32 %v379, 0.0
  %v398 = vmax.f32 %v384, 0.0
  %v399 = vmax.f32 %v389, 0.0
  %v400 = vmax.f32 %v394, 0.0
  %v405 = vrot.slane %v397, 7
  %v406 = vrot.slane %v398, 7
  %v407 = vsel %vm40, %v405, %v406
  %v408 = vrot.slane %v399, 7
  %v409 = vrot.slane %v400, 7
  %v410 = vsel %vm40, %v408, %v409
  %v415 = vsel %vm40, 0.0, %v405
  %v416 = vsel %vm40, 0.0, %v408
  %v417 = vrot.slane %v397, 1
  %v418 = vrot.slane %v398, 1
  %v419 = vsel %vm53, %v417, %v418
  %v420 = vrot.slane %v399, 1
  %v421 = vrot.slane %v400, 1
  %v422 = vsel %vm53, %v420, %v421
  %v425 = vsel %vm53, %v418, 0.0
  %v426 = vsel %vm53, %v421, 0.0
  %427 = vrot.lane.b32.xlu0 %v397, 32
  %v428 = vpop.permute.xlu0 %427
  %429 = vrot.lane.b32.xlu0 %v398, 32
  %v430 = vpop.permute.xlu0 %429
  %431 = vrot.lane.b32.xlu0 %v399, 32
  %v432 = vpop.permute.xlu0 %431
  %433 = vrot.lane.b32.xlu0 %v400, 32
  %v434 = vpop.permute.xlu0 %433
  %441 = vrot.lane.b32.xlu0 %v419, 64
  %v442 = vpop.permute.xlu0 %441
  %443 = vrot.lane.b32.xlu0 %v425, 64
  %v444 = vpop.permute.xlu0 %443
  %445 = vrot.lane.b32.xlu0 %v422, 64
  %v446 = vpop.permute.xlu0 %445
  %447 = vrot.lane.b32.xlu0 %v426, 64
  %v448 = vpop.permute.xlu0 %447
  %v453 = vsel %vm90, %v415, %v428
  %v454 = vsel %vm90, %v407, %v430
  %v455 = vsel %vm90, %v416, %v432
  %v456 = vsel %vm90, %v410, %v434
  %v457 = vsel %vm95, %v453, %v442
  %v458 = vsel %vm95, %v454, %v444
  %v459 = vsel %vm95, %v455, %v446
  %v460 = vsel %vm95, %v456, %v448
  %v461 = vld [vmem:[%s5] sm:$0xff]
  %v462 = vld [vmem:[%s5 + $0x8] sm:$0xff]
  %v463 = vld [vmem:[%s5 + $0x10] sm:$0xff]
  %v464 = vld [vmem:[%s5 + $0x18] sm:$0xff]
  %v465 = vld [vmem:[%s5 + $0x20] sm:$0xff]
  %v466 = vld [vmem:[%s5 + $0x28] sm:$0xff]
  %v467 = vld [vmem:[%s5 + $0x30] sm:$0xff]
  %v468 = vld [vmem:[%s5 + $0x38] sm:$0xff]
  %v469 = vld [vmem:[%s5 + $0x40] sm:$0xff]
  %v470 = vld [vmem:[%s5 + $0x48] sm:$0xff]
  %v471 = vld [vmem:[%s5 + $0x50] sm:$0xff]
  %v472 = vld [vmem:[%s5 + $0x58] sm:$0xff]
  %v473 = vld [vmem:[%s6] sm:$0x1]
  %v475 = vlaneseq
  %v476 = vshrl.u32 %v475, 7
  %v477 = vsub.s32 0, %v476
  %v478 = vrot.slane %v473, %v477
  %v481 = vsel %vm119, %v457, 0
  %v484 = vsel %vm119, %v458, 0
  %v487 = vsel %vm119, %v459, 0
  %v490 = vsel %vm119, %v460, 0
  %492 = vmatprep.subr.mxu0 0.0
  %493 = vmatpush1.msra.mxu0 0.0
  %494 = vmatprep.subr.mxu0 0.0
  %495 = vmatpush1.msra.mxu0 0.0
  %496 = vmatprep.subr.mxu0 0.0
  %497 = vmatpush1.msra.mxu0 0.0
  %498 = vmatprep.subr.mxu0 0.0
  %499 = vmatpush1.msra.mxu0 0.0
  %500 = vmatprep.subr.mxu0 0.0
  %501 = vmatpush1.msra.mxu0 %v472
  %502 = vmatprep.subr.mxu0 0.0
  %503 = vmatpush1.msra.mxu0 %v471
  %504 = vmatprep.subr.mxu0 0.0
  %505 = vmatpush1.msra.mxu0 %v470
  %506 = vmatprep.subr.mxu0 0.0
  %507 = vmatpush1.msra.mxu0 %v469
  %508 = vmatprep.subr.mxu0 0.0
  %509 = vmatpush1.msra.mxu0 %v468
  %510 = vmatprep.subr.mxu0 0.0
  %511 = vmatpush1.msra.mxu0 %v467
  %512 = vmatprep.subr.mxu0 0.0
  %513 = vmatpush1.msra.mxu0 %v466
  %514 = vmatprep.subr.mxu0 0.0
  %515 = vmatpush1.msra.mxu0 %v465
  %516 = vmatprep.subr.mxu0 0.0
  %517 = vmatpush1.msra.mxu0 %v464
  %518 = vmatprep.subr.mxu0 0.0
  %519 = vmatpush1.msra.mxu0 %v463
  %520 = vmatprep.subr.mxu0 0.0
  %521 = vmatpush1.msra.mxu0 %v462
  %522 = vmatprep.subr.mxu0 0.0
  %523 = vmatpush1.msra.mxu0 %v461
  %524 = vmatprep.subr.mxu0 0.0
  %525 = vmatpush2.msra.mxu0 0.0
  %526 = vmatprep.subr.mxu0 0.0
  %527 = vmatpush2.msra.mxu0 0.0
  %528 = vmatprep.subr.mxu0 0.0
  %529 = vmatpush2.msra.mxu0 0.0
  %530 = vmatprep.subr.mxu0 0.0
  %531 = vmatpush2.msra.mxu0 0.0
  %532 = vmatprep.subr.mxu0 0.0
  %533 = vmatpush2.msra.mxu0 0.0
  %534 = vmatprep.subr.mxu0 0.0
  %535 = vmatpush2.msra.mxu0 0.0
  %536 = vmatprep.subr.mxu0 0.0
  %537 = vmatpush2.msra.mxu0 0.0
  %538 = vmatprep.subr.mxu0 0.0
  %539 = vmatpush2.msra.mxu0 0.0
  %540 = vmatprep.subr.mxu0 0.0
  %541 = vmatpush2.msra.mxu0 0.0
  %542 = vmatprep.subr.mxu0 0.0
  %543 = vmatpush2.msra.mxu0 0.0
  %544 = vmatprep.subr.mxu0 0.0
  %545 = vmatpush2.msra.mxu0 0.0
  %546 = vmatprep.subr.mxu0 0.0
  %547 = vmatpush2.msra.mxu0 0.0
  %548 = vmatprep.subr.mxu0 0.0
  %549 = vmatpush2.msra.mxu0 0.0
  %550 = vmatprep.subr.mxu0 0.0
  %551 = vmatpush2.msra.mxu0 0.0
  %552 = vmatprep.subr.mxu0 0.0
  %553 = vmatpush2.msra.mxu0 0.0
  %554 = vmatprep.subr.mxu0 0.0
  %555 = vmatpush2.msra.mxu0 0.0
  %556 = vmatprep.mubr.f32.mxu0 0.0
  %557 = vmatmul.mubr.f32.gmra.mxu0 %v481
  %v558 = vpop.f32.mrf.mxu0
  %v559 = vadd.f32 %v478, %v558
  %v560 = vpop.f32.mrf.mxu0
  %561 = vmatprep.mubr.f32.mxu0 0.0
  %562 = vmatmul.mubr.f32.gmra.mxu0 %v484
  %v563 = vpop.f32.mrf.mxu0
  %v564 = vadd.f32 %v478, %v563
  %v565 = vpop.f32.mrf.mxu0
  %566 = vmatprep.mubr.f32.mxu0 0.0
  %567 = vmatmul.mubr.f32.gmra.mxu0 %v487
  %v568 = vpop.f32.mrf.mxu0
  %v569 = vadd.f32 %v478, %v568
  %v570 = vpop.f32.mrf.mxu0
  %571 = vmatprep.mubr.f32.mxu0 0.0
  %572 = vmatmul.mubr.f32.gmra.mxu0 %v490
  %v573 = vpop.f32.mrf.mxu0
  %v574 = vadd.f32 %v478, %v573
  %v575 = vpop.f32.mrf.mxu0
  %576 = vdwg.mxu0
  %v577 = vmax.f32 %v559, 0.0
  %v578 = vmax.f32 %v564, 0.0
  %v579 = vmax.f32 %v569, 0.0
  %v580 = vmax.f32 %v574, 0.0
  %v581 = vld [vmem:[%s7] sm:$0xff]
  %v582 = vld [vmem:[%s7 + $0x8] sm:$0xff]
  %v583 = vld [vmem:[%s7 + $0x10] sm:$0xff]
  %v584 = vld [vmem:[%s7 + $0x18] sm:$0xff]
  %v585 = vld [vmem:[%s8] sm:$0x1]
  %v587 = vlaneseq
  %v588 = vshrl.u32 %v587, 7
  %v589 = vsub.s32 0, %v588
  %v590 = vrot.slane %v585, %v589
  %v593 = vsel %vm90, %v577, 0
  %v596 = vsel %vm90, %v578, 0
  %v599 = vsel %vm90, %v579, 0
  %v602 = vsel %vm90, %v580, 0
  %604 = vmatprep.subr.mxu0 0.0
  %605 = vmatpush1.msra.mxu0 0.0
  %606 = vmatprep.subr.mxu0 0.0
  %607 = vmatpush1.msra.mxu0 0.0
  %608 = vmatprep.subr.mxu0 0.0
  %609 = vmatpush1.msra.mxu0 0.0
  %610 = vmatprep.subr.mxu0 0.0
  %611 = vmatpush1.msra.mxu0 0.0
  %612 = vmatprep.subr.mxu0 0.0
  %613 = vmatpush1.msra.mxu0 0.0
  %614 = vmatprep.subr.mxu0 0.0
  %615 = vmatpush1.msra.mxu0 0.0
  %616 = vmatprep.subr.mxu0 0.0
  %617 = vmatpush1.msra.mxu0 0.0
  %618 = vmatprep.subr.mxu0 0.0
  %619 = vmatpush1.msra.mxu0 0.0
  %620 = vmatprep.subr.mxu0 0.0
  %621 = vmatpush1.msra.mxu0 0.0
  %622 = vmatprep.subr.mxu0 0.0
  %623 = vmatpush1.msra.mxu0 0.0
  %624 = vmatprep.subr.mxu0 0.0
  %625 = vmatpush1.msra.mxu0 0.0
  %626 = vmatprep.subr.mxu0 0.0
  %627 = vmatpush1.msra.mxu0 0.0
  %628 = vmatprep.subr.mxu0 0.0
  %629 = vmatpush1.msra.mxu0 %v584
  %630 = vmatprep.subr.mxu0 0.0
  %631 = vmatpush1.msra.mxu0 %v583
  %632 = vmatprep.subr.mxu0 0.0
  %633 = vmatpush1.msra.mxu0 %v582
  %634 = vmatprep.subr.mxu0 0.0
  %635 = vmatpush1.msra.mxu0 %v581
  %636 = vmatprep.subr.mxu0 0.0
  %637 = vmatpush2.msra.mxu0 0.0
  %638 = vmatprep.subr.mxu0 0.0
  %639 = vmatpush2.msra.mxu0 0.0
  %640 = vmatprep.subr.mxu0 0.0
  %641 = vmatpush2.msra.mxu0 0.0
  %642 = vmatprep.subr.mxu0 0.0
  %643 = vmatpush2.msra.mxu0 0.0
  %644 = vmatprep.subr.mxu0 0.0
  %645 = vmatpush2.msra.mxu0 0.0
  %646 = vmatprep.subr.mxu0 0.0
  %647 = vmatpush2.msra.mxu0 0.0
  %648 = vmatprep.subr.mxu0 0.0
  %649 = vmatpush2.msra.mxu0 0.0
  %650 = vmatprep.subr.mxu0 0.0
  %651 = vmatpush2.msra.mxu0 0.0
  %652 = vmatprep.subr.mxu0 0.0
  %653 = vmatpush2.msra.mxu0 0.0
  %654 = vmatprep.subr.mxu0 0.0
  %655 = vmatpush2.msra.mxu0 0.0
  %656 = vmatprep.subr.mxu0 0.0
  %657 = vmatpush2.msra.mxu0 0.0
  %658 = vmatprep.subr.mxu0 0.0
  %659 = vmatpush2.msra.mxu0 0.0
  %660 = vmatprep.subr.mxu0 0.0
  %661 = vmatpush2.msra.mxu0 0.0
  %662 = vmatprep.subr.mxu0 0.0
  %663 = vmatpush2.msra.mxu0 0.0
  %664 = vmatprep.subr.mxu0 0.0
  %665 = vmatpush2.msra.mxu0 0.0
  %666 = vmatprep.subr.mxu0 0.0
  %667 = vmatpush2.msra.mxu0 0.0
  %668 = vmatprep.mubr.f32.mxu0 0.0
  %669 = vmatmul.mubr.f32.gmra.mxu0 %v593
  %v670 = vpop.f32.mrf.mxu0
  %v671 = vadd.f32 %v590, %v670
  %v672 = vpop.f32.mrf.mxu0
  %673 = vmatprep.mubr.f32.mxu0 0.0
  %674 = vmatmul.mubr.f32.gmra.mxu0 %v596
  %v675 = vpop.f32.mrf.mxu0
  %v676 = vadd.f32 %v590, %v675
  %v677 = vpop.f32.mrf.mxu0
  %678 = vmatprep.mubr.f32.mxu0 0.0
  %679 = vmatmul.mubr.f32.gmra.mxu0 %v599
  %v680 = vpop.f32.mrf.mxu0
  %v681 = vadd.f32 %v590, %v680
  %v682 = vpop.f32.mrf.mxu0
  %683 = vmatprep.mubr.f32.mxu0 0.0
  %684 = vmatmul.mubr.f32.gmra.mxu0 %v602
  %v685 = vpop.f32.mrf.mxu0
  %v686 = vadd.f32 %v590, %v685
  %v687 = vpop.f32.mrf.mxu0
  %688 = vdwg.mxu0
  %v689 = vxor.u32 %v671, 2147483648
  %v690 = vxor.u32 %v676, 2147483648
  %v691 = vxor.u32 %v681, 2147483648
  %v692 = vxor.u32 %v686, 2147483648
  %v693 = vmul.f32 %v689, 1.442695
  %v694 = vpow.pop %v693
  %v695 = vmul.f32 %v690, 1.442695
  %v696 = vpow.pop %v695
  %v697 = vmul.f32 %v691, 1.442695
  %v698 = vpow.pop %v697
  %v699 = vmul.f32 %v692, 1.442695
  %v700 = vpow.pop %v699
  %v701 = vadd.f32 %v694, 1.0
  %v702 = vadd.f32 %v696, 1.0
  %v703 = vadd.f32 %v698, 1.0
  %v704 = vadd.f32 %v700, 1.0
  %v705 = vrcp.pop %v701
  %v706 = vmul.f32 1.0, %v705
  %v707 = vrcp.pop %v702
  %v708 = vmul.f32 1.0, %v707
  %v709 = vrcp.pop %v703
  %v710 = vmul.f32 1.0, %v709
  %v711 = vrcp.pop %v704
  %v712 = vmul.f32 1.0, %v711
  %vm713 = vcmask 23552
  %714 = vst.msk [vmem:[%s9] sm:$0xff] %vm713, %v706
  %715 = vst.msk [vmem:[%s9 + $0x8] sm:$0xff] %vm713, %v708
  %716 = vst.msk [vmem:[%s9 + $0x10] sm:$0xff] %vm713, %v710
  %717 = vst.msk [vmem:[%s9 + $0x18] sm:$0xff] %vm713, %v712
  // Predicated region
  $region38: #{tpu_custom_call.1} parent=0 // pred_check
    _
  $region39: #{tpu_custom_call.1} parent=0 // pred_check_branch
    %719 = sbr.rel (0) target = $region41
  $region40: #{tpu_custom_call.1} parent=0 // pred_region
    _
  $region41: #{tpu_custom_call.1} parent=0 // pred_fallthru
    _
  // Predicated region
  $region42: #{tpu_custom_call.1} parent=0 // pred_check
    _
  $region43: #{tpu_custom_call.1} parent=0 // pred_check_branch
    %721 = sbr.rel (0) target = $region45
  $region44: #{tpu_custom_call.1} parent=0 // pred_region
    _
  $region45: #{tpu_custom_call.1} parent=0 // pred_fallthru
    _

</llo_original>
